<compile_context>
chip_gen: v7x
topology: tpu7x:2x2x1
jax: 0.10.0
libtpu: 0.0.40
codegen_flags: <defaults>
</compile_context>

<pallas_src>
import functools

import jax
import jax.numpy as jnp
from jax.experimental import pallas as pl
from jax.experimental.pallas import tpu as pltpu


_MAX_TM = 512    # x rows per grid step
_MAX_TN = 1024   # output features per grid step (lane-dense)
_MAX_TK = 2048   # contraction length per grid step (single k-tile if possible)


def _round_up(x: int, m: int) -> int:
    return ((x + m - 1) // m) * m


def _cdiv(a: int, b: int) -> int:
    return -(-a // b)


def _kernel_single_k(step_ref, x_ref, w_ref, o_ref):
    # step_ref is a scalar-prefetch SMEM ref consumed by the weight index_map.
    del step_ref
    o_ref[...] = jnp.dot(
        x_ref[...], w_ref[...], preferred_element_type=jnp.float32
    ).astype(o_ref.dtype)


def _kernel_multi_k(step_ref, x_ref, w_ref, o_ref):
    del step_ref
    k_idx = pl.program_id(2)

    @pl.when(k_idx == 0)
    def _():
        o_ref[...] = jnp.zeros_like(o_ref)

    # Output block index is independent of k, so the f32 o_ref is the resident
    # accumulator; no separate VMEM scratch needed.
    o_ref[...] += jnp.dot(
        x_ref[...], w_ref[...], preferred_element_type=jnp.float32
    )


@functools.partial(jax.jit, static_argnames=("n", "tm", "tn", "tk"))
def _tied_projection_2d(x2d, w_kn, step_arr, *, n, tm, tn, tk):
    m, k = x2d.shape
    _, k_pad, n_pad = w_kn.shape
    m_pad = _round_up(m, tm)

    # bf16 datapath; only x is (cheaply) padded per call — the weight stack was
    # padded/transposed once at module init.
    x2d = x2d.astype(jnp.bfloat16)
    if (m_pad, k_pad) != (m, k):
        x2d = jnp.pad(x2d, ((0, m_pad - m), (0, k_pad - k)))

    n_tiles = n_pad // tn
    m_tiles = m_pad // tm
    k_tiles = k_pad // tk
    grid = (n_tiles, m_tiles, k_tiles)

    kernel = _kernel_single_k if k_tiles == 1 else _kernel_multi_k

    grid_spec = pltpu.PrefetchScalarGridSpec(
        num_scalar_prefetch=1,
        grid=grid,
        in_specs=[
            # x tile: depends on (m, k) only.
            pl.BlockSpec((tm, tk), lambda ni, mi, ki, step_ref: (mi, ki)),
            # Pre-transposed weights (steps, K_pad, N_pad): step axis squeezed,
            # canonical (tk, tn) RHS tile -> no in-kernel transpose.  Block
            # index depends only on (step, k, n), so the tile stays VMEM
            # resident across consecutive M tiles when k_tiles == 1.
            pl.BlockSpec(
                (None, tk, tn),
                lambda ni, mi, ki, step_ref: (step_ref[0], ki, ni),
            ),
        ],
        out_specs=pl.BlockSpec((tm, tn), lambda ni, mi, ki, step_ref: (mi, ni)),
    )

    # Explicit double-buffered VMEM footprint: bf16 inputs, f32 output.
    vmem_bytes = 2 * (tm * tk + tk * tn) * 2 + 2 * tm * tn * 4
    vmem_limit = min(48 << 20, max(32 << 20, int(vmem_bytes * 3 // 2)))

    cost = pl.CostEstimate(
        flops=2 * m_pad * n_pad * k_pad,
        transcendentals=0,
        bytes_accessed=(m_pad * k_pad + k_pad * n_pad) * 2 + m_pad * n_pad * 4,
    )

    out_padded = pl.pallas_call(
        kernel,
        out_shape=jax.ShapeDtypeStruct((m_pad, n_pad), jnp.float32),
        grid_spec=grid_spec,
        compiler_params=pltpu.CompilerParams(
            dimension_semantics=("parallel", "parallel", "arbitrary"),
            vmem_limit_bytes=vmem_limit,
        ),
        cost_estimate=cost,
    )(step_arr, x2d, w_kn)

    if (m_pad, n_pad) != (m, n):
        out_padded = out_padded[:m, :n]
    return out_padded


class MultiStepTiedProjection:
    """Pallas port of the PyTorch module: forward(x, step) = x @ weights[step].T."""

    def __init__(self, weights):
        if isinstance(weights, (list, tuple)):
            w = jnp.stack([jnp.asarray(p) for p in weights])
        else:
            w = jnp.asarray(weights)
        self.total_steps, self.output_dim, self.input_dim = w.shape

        # Tile plan for the fixed N / K axes (128-aligned, lane-dense output).
        n0 = _round_up(self.output_dim, 128)
        self._n_tiles = _cdiv(n0, _MAX_TN)
        self._tn = _round_up(_cdiv(n0, self._n_tiles), 128)
        n_pad = self._tn * self._n_tiles

        k0 = _round_up(self.input_dim, 128)
        self._k_tiles = _cdiv(k0, _MAX_TK)
        self._tk = _round_up(_cdiv(k0, self._k_tiles), 128)
        k_pad = self._tk * self._k_tiles

        # One-time weight layout (init, not per call): transpose to
        # (steps, K, N), zero-pad to tile-aligned extents, cast to bf16.
        w_kn = jnp.transpose(w, (0, 2, 1)).astype(jnp.bfloat16)
        w_kn = jnp.pad(
            w_kn,
            ((0, 0),
             (0, k_pad - self.input_dim),
             (0, n_pad - self.output_dim)),
        )
        self.weights_kn = jax.block_until_ready(w_kn)

    def _plan_tm(self, m: int) -> int:
        m16 = _round_up(m, 16)   # bf16 sublane packing for the x tile
        if m16 > _MAX_TM:
            return _MAX_TM
        tm = m16
        # v7x megacore: if N collapsed to a single tile, split M into two tiles
        # so the second TensorCore gets work (harmless on single-TC v5e/v6e).
        if self._n_tiles == 1 and m16 >= 256:
            tm = _round_up(_cdiv(m16, 2), 16)
        return tm

    def __call__(self, x, step):
        return self.forward(x, step)

    def forward(self, x, step):
        *lead, input_dim = x.shape
        assert input_dim == self.input_dim
        x2d = x.reshape(-1, input_dim)
        m = x2d.shape[0]
        tm = self._plan_tm(m)
        step_arr = jnp.asarray([step], dtype=jnp.int32)
        out2d = _tied_projection_2d(
            x2d, self.weights_kn, step_arr,
            n=self.output_dim, tm=tm, tn=self._tn, tk=self._tk,
        )
        return out2d.astype(x.dtype).reshape(*lead, self.output_dim)


if __name__ == "__main__":
    key = jax.random.PRNGKey(0)
    kx, kw, kx2, kw2 = jax.random.split(key, 4)

    ok = True
    # bf16 datapath with f32 accumulation -> loosened tolerances vs. the f32
    # reference (quantization error ~0.4% relative on inputs).
    ATOL = RTOL = 2e-2

    # --- Case 1: module-sized small shapes (padding path, single tile). ---
    batch, seq = 2, 8
    input_dim, output_dim, total_steps = 32, 32, 3
    weights = (
        jax.random.normal(kw, (total_steps, output_dim, input_dim), jnp.float32)
        * 0.02
    )
    x = jax.random.normal(kx, (batch, seq, input_dim), jnp.float32)
    proj = MultiStepTiedProjection(weights)
    for step in range(total_steps):
        out = jax.block_until_ready(proj(x, step))
        ref = jnp.einsum("bsk,nk->bsn", x, weights[step])
        if out.shape != (batch, seq, output_dim):
            ok = False
        if not jnp.allclose(out, ref, atol=ATOL, rtol=RTOL):
            ok = False

    # --- Case 2: larger shapes (2 M-tiles for megacore, lane-dense N=384). ---
    batch2, seq2 = 2, 160
    input_dim2, output_dim2, total_steps2 = 256, 384, 2
    weights2 = (
        jax.random.normal(
            kw2, (total_steps2, output_dim2, input_dim2), jnp.float32
        )
        * 0.02
    )
    x2 = jax.random.normal(kx2, (batch2, seq2, input_dim2), jnp.float32)
    proj2 = MultiStepTiedProjection(weights2)
    for step in range(total_steps2):
        out2 = jax.block_until_ready(proj2(x2, step))
        ref2 = jnp.einsum("bsk,nk->bsn", x2, weights2[step])
        if out2.shape != (batch2, seq2, output_dim2):
            ok = False
        if not jnp.allclose(out2, ref2, atol=ATOL, rtol=RTOL):
            ok = False

    if ok:
        print("KERNEL_OK")
</pallas_src>

<mosaic_0001>
module attributes {stable_mosaic.version = 11 : i64} {
  func.func @_kernel_single_k(%arg0: i32, %arg1: i32, %arg2: i32, %arg3: memref<1xi32, #tpu.memory_space<smem>>, %arg4: memref<16x128xbf16, #tpu.memory_space<vmem>>, %arg5: memref<1x128x128xbf16, #tpu.memory_space<vmem>>, %arg6: memref<16x128xf32, #tpu.memory_space<vmem>>) attributes {dimension_semantics = [#tpu.dimension_semantics<parallel>, #tpu.dimension_semantics<parallel>, #tpu.dimension_semantics<arbitrary>], iteration_bounds = array<i64: 1, 1, 1>, scalar_prefetch = 1 : i64, scratch_operands = 0 : i64, tpu.core_type = #tpu.core_type<tc>, window_params = [{transform_indices = @transform_0, window_bounds = array<i64: 16, 128>}, {transform_indices = @transform_1, window_bounds = array<i64: 1, 128, 128>}, {transform_indices = @transform_2, window_bounds = array<i64: 16, 128>}]} {
    %c0 = arith.constant 0 : index
    %c0_0 = arith.constant 0 : index
    %0 = vector.load %arg4[%c0, %c0_0] : memref<16x128xbf16, #tpu.memory_space<vmem>>, vector<16x128xbf16>
    %c0_1 = arith.constant 0 : index
    %c0_2 = arith.constant 0 : index
    %c0_3 = arith.constant 0 : index
    %1 = vector.load %arg5[%c0_1, %c0_2, %c0_3] : memref<1x128x128xbf16, #tpu.memory_space<vmem>>, vector<1x128x128xbf16>
    %2 = vector.shape_cast %1 : vector<1x128x128xbf16> to vector<128x128xbf16>
    %cst = arith.constant dense<0.000000e+00> : vector<16x128xf32>
    %3 = tpu.matmul %0, %2, %cst {dimension_numbers = #tpu.dot_dimension_numbers<[1], [0], [0], [1], [0, 0, 1, 1], [], []>} : vector<16x128xbf16>, vector<128x128xbf16>, vector<16x128xf32> -> vector<16x128xf32>
    %c0_4 = arith.constant 0 : index
    %c0_5 = arith.constant 0 : index
    %4 = vector.load %arg6[%c0_4, %c0_5] : memref<16x128xf32, #tpu.memory_space<vmem>>, vector<16x128xf32>
    tpu.vector_store %arg6[%c0_4, %c0_5], %3 {strides = array<i32>} : memref<16x128xf32, #tpu.memory_space<vmem>>, vector<16x128xf32>,
    return
  }
  func.func @transform_0(%arg0: i32, %arg1: i32, %arg2: i32, %arg3: memref<1xi32, #tpu.memory_space<smem>>) -> (i32, i32) {
    %c0_i32 = arith.constant 0 : i32
    return %arg1, %arg2 : i32, i32
  }
  func.func @transform_1(%arg0: i32, %arg1: i32, %arg2: i32, %arg3: memref<1xi32, #tpu.memory_space<smem>>) -> (i32, i32, i32) {
    %c0 = arith.constant 0 : index
    %0 = memref.load %arg3[%c0] : memref<1xi32, #tpu.memory_space<smem>>
    %c0_i32 = arith.constant 0 : i32
    return %0, %arg2, %arg0 : i32, i32, i32
  }
  func.func @transform_2(%arg0: i32, %arg1: i32, %arg2: i32, %arg3: memref<1xi32, #tpu.memory_space<smem>>) -> (i32, i32) {
    %c0_i32 = arith.constant 0 : i32
    return %arg1, %arg0 : i32, i32
  }
}

</mosaic_0001>

<llo_original>
// kernel: _tied_projection_2d.1
$region0: #{_tied_projection_2d.1}
  #allocation0 [shape = 'u32[]', space=smem, size = 0x4, offset = 0x4, fixed_abs, tag = 'smem constant byte address 0x4 - core index']
  #allocation1 [shape = 'u32[144,128]{1,0:T(1,128)}', space=vmem, size = 0x12000, scoped, tag = 'internal scratch']
  #allocation2 [shape = 's32[1]{0}', space=sflag, size = 0x4, scoped, tag = 'scoped memory for _tied_projection_2d.1']
  #allocation3 [shape = 's32[1]{0:T(128)S(6)}', space=smem, size = 0x200, scoped, tag = 'prefetched SMEM operand 0']
  %s0 = inlined_call_operand.<no memory space> [shape: s32[1], index: 0, kind: input, shape index: {}]
  %s1 = inlined_call_operand.vmem [shape: bf16[16,128], index: 1, kind: input, shape index: {}]
  %s2 = inlined_call_operand.hbm [shape: bf16[3,128,128], index: 2, kind: input, shape index: {}]
  %s3 = inlined_call_operand.hbm [shape: f32[16,128], index: 3, kind: output, shape index: {}]
  %s4 = sld [smem:[#allocation0]]
  $region22: #{_tied_projection_2d.1} parent=0
    _
  %s6 = ssub.s32 1, %s4
  %s7 = scalar_select 0, %s6, %s4
  %8 = sst [smem:[#allocation3]] %s0
  $region1: #{_tied_projection_2d.1} parent=0
    #allocation4 [shape = 'u8[32768]{0}', space=vmem, size = 0x8000, scoped, tag = 'input window, operand 2, single buffered']
    #allocation5 [shape = 's32[1]{0}', space=sflag, size = 0x4, scoped, tag = 'scoped memory for _tied_projection_2d.1']
    #allocation6 [shape = 's32[1]{0}', space=sflag, size = 0x4, scoped, tag = 'scoped memory for _tied_projection_2d.1']
    #allocation7 [shape = 'u8[8192]{0}', space=vmem, size = 0x2000, scoped, tag = 'output window, operand 0, single buffered']
    %9 = vsyncpa [#allocation5], 0
    %10 = vsyncpa [#allocation6], 0
    // Predicated region
    $region2: #{_tied_projection_2d.1} parent=1 // pred_check
      _
    $region3: #{_tied_projection_2d.1} parent=1 // pred_check_branch
      %12 = sbr.rel (0) target = $region5
    $region4: #{_tied_projection_2d.1} parent=1 // pred_region
      _
    $region5: #{_tied_projection_2d.1} parent=1 // pred_fallthru
      _
    // Predicated region
    $region6: #{_tied_projection_2d.1} parent=1 // pred_check
      _
    $region7: #{_tied_projection_2d.1} parent=1 // pred_check_branch
      %14 = sbr.rel (0) target = $region9
    $region8: #{_tied_projection_2d.1} parent=1 // pred_region
      %s15 = sld [smem:[#allocation3]]
      %s17 = ssub.s32 1024, 1024
      %18 = vsyncadd [#allocation5], %s17
      %s19 = smul.addr %s15, 16
      %s20 = smul.addr %s19, 64
      %s21 = scalar_lea.hbm %s2, %s20
      %s22 = sshll.u32 [#allocation4], 4
      %s23 = int_to_ptr.vmem [resolvable:$true] %s22
      %28 = dma.hbm_to_vmem [thread:$0]  %s21, 1024, %s23, [#allocation5], 64, 64, 4
    $region9: #{_tied_projection_2d.1} parent=1 // pred_fallthru
      _
    // Predicated region
    $region10: #{_tied_projection_2d.1} parent=1 // pred_check
      _
    $region11: #{_tied_projection_2d.1} parent=1 // pred_check_branch
      %30 = sbr.rel (0) target = $region13
    $region12: #{_tied_projection_2d.1} parent=1 // pred_region
      %31 = dma.done [#allocation5], 1024
    $region13: #{_tied_projection_2d.1} parent=1 // pred_fallthru
      _
    %s32 = sld [smem:[#allocation3]]
    %v34 = vld [vmem:[%s1] sm:$0xf]
    %v35 = vld [vmem:[%s1 + $0x4] sm:$0xf]
    %v36 = vld [vmem:[#allocation4] sm:$0xf]
    %v37 = vld [vmem:[#allocation4 + $0x4] sm:$0xf]
    %v38 = vld [vmem:[#allocation4 + $0x8] sm:$0xf]
    %v39 = vld [vmem:[#allocation4 + $0xc] sm:$0xf]
    %v40 = vld [vmem:[#allocation4 + $0x10] sm:$0xf]
    %v41 = vld [vmem:[#allocation4 + $0x14] sm:$0xf]
    %v42 = vld [vmem:[#allocation4 + $0x18] sm:$0xf]
    %v43 = vld [vmem:[#allocation4 + $0x1c] sm:$0xf]
    %v44 = vld [vmem:[#allocation4 + $0x20] sm:$0xf]
    %v45 = vld [vmem:[#allocation4 + $0x24] sm:$0xf]
    %v46 = vld [vmem:[#allocation4 + $0x28] sm:$0xf]
    %v47 = vld [vmem:[#allocation4 + $0x2c] sm:$0xf]
    %v48 = vld [vmem:[#allocation4 + $0x30] sm:$0xf]
    %v49 = vld [vmem:[#allocation4 + $0x34] sm:$0xf]
    %v50 = vld [vmem:[#allocation4 + $0x38] sm:$0xf]
    %v51 = vld [vmem:[#allocation4 + $0x3c] sm:$0xf]
    %v54 = vunpack.c.l.b16 %v34
    %v55 = vunpack.c.l.b16 %v35
    %v56 = vpack.c.b16 %v55, %v54
    %v74 = vunpack.c.l.b16 %v36
    %v75 = vunpack.c.l.b16 %v37
    %v76 = vunpack.c.l.b16 %v38
    %v77 = vunpack.c.l.b16 %v39
    %v78 = vunpack.c.l.b16 %v40
    %v79 = vunpack.c.l.b16 %v41
    %v80 = vunpack.c.l.b16 %v42
    %v81 = vunpack.c.l.b16 %v43
    %v82 = vunpack.c.l.b16 %v44
    %v83 = vunpack.c.l.b16 %v45
    %v84 = vunpack.c.l.b16 %v46
    %v85 = vunpack.c.l.b16 %v47
    %v86 = vunpack.c.l.b16 %v48
    %v87 = vunpack.c.l.b16 %v49
    %v88 = vunpack.c.l.b16 %v50
    %v89 = vunpack.c.l.b16 %v51
    %v90 = vpack.c.b16 %v75, %v74
    %v91 = vpack.c.b16 %v77, %v76
    %v92 = vpack.c.b16 %v79, %v78
    %v93 = vpack.c.b16 %v81, %v80
    %v94 = vpack.c.b16 %v83, %v82
    %v95 = vpack.c.b16 %v85, %v84
    %v96 = vpack.c.b16 %v87, %v86
    %v97 = vpack.c.b16 %v89, %v88
    %106 = vmatprep.subr.bf16.mxu0 0
    %107 = vmatpush1.bf16.msra.mxu0 %v90
    %108 = vmatprep.subr.bf16.mxu0 0
    %109 = vmatpush1.bf16.msra.mxu0 %v91
    %110 = vmatprep.subr.bf16.mxu0 0
    %111 = vmatpush1.bf16.msra.mxu0 %v92
    %112 = vmatprep.subr.bf16.mxu0 0
    %113 = vmatpush1.bf16.msra.mxu0 %v93
    %114 = vmatprep.subr.bf16.mxu0 0
    %115 = vmatpush1.bf16.msra.mxu0 %v94
    %116 = vmatprep.subr.bf16.mxu0 0
    %117 = vmatpush1.bf16.msra.mxu0 %v95
    %118 = vmatprep.subr.bf16.mxu0 0
    %119 = vmatpush1.bf16.msra.mxu0 %v96
    %120 = vmatprep.subr.bf16.mxu0 0
    %121 = vmatpush1.bf16.msra.mxu0 %v97
    %122 = vmatprep.subr.bf16.mxu0 0
    %123 = vmatpush1.bf16.msra.mxu0 0
    %124 = vmatprep.subr.bf16.mxu0 0
    %125 = vmatpush1.bf16.msra.mxu0 0
    %126 = vmatprep.subr.bf16.mxu0 0
    %127 = vmatpush1.bf16.msra.mxu0 0
    %128 = vmatprep.subr.bf16.mxu0 0
    %129 = vmatpush1.bf16.msra.mxu0 0
    %130 = vmatprep.subr.bf16.mxu0 0
    %131 = vmatpush1.bf16.msra.mxu0 0
    %132 = vmatprep.subr.bf16.mxu0 0
    %133 = vmatpush1.bf16.msra.mxu0 0
    %134 = vmatprep.subr.bf16.mxu0 0
    %135 = vmatpush1.bf16.msra.mxu0 0
    %136 = vmatprep.subr.bf16.mxu0 0
    %137 = vmatpush1.bf16.msra.mxu0 0
    %138 = vmatprep.mubr.bf16.mxu0 0
    %139 = vmatmul.mubr.bf16.gmra.mrb[0].mxu0 %v56
    %v140 = vpop.f32.mrb[0].mxu0
    %v141 = vadd.f32 0.0, %v140
    %v142 = vpop.f32.mrb[0].mxu0
    %v143 = vpop.f32.mrb[0].mxu0
    %v144 = vadd.f32 0.0, %v143
    %v145 = vpop.f32.mrb[0].mxu0
    %146 = vdwg.mxu0
    %147 = vst [vmem:[#allocation7] sm:$0xff] %v141
    %148 = vst [vmem:[#allocation7 + $0x8] sm:$0xff] %v144
    // Predicated region
    $region14: #{_tied_projection_2d.1} parent=1 // pred_check
      _
    $region15: #{_tied_projection_2d.1} parent=1 // pred_check_branch
      %150 = sbr.rel (0) target = $region17
    $region16: #{_tied_projection_2d.1} parent=1 // pred_region
      %s152 = ssub.s32 256, 256
      %153 = vsyncadd [#allocation6], %s152
      %s154 = sshll.u32 [#allocation7], 4
      %s155 = int_to_ptr.vmem [resolvable:$true] %s154
      %160 = dma.vmem_to_hbm [thread:$0]  %s155, 256, %s3, [#allocation6], 128, 128, 8
    $region17: #{_tied_projection_2d.1} parent=1 // pred_fallthru
      _
    // Predicated region
    $region18: #{_tied_projection_2d.1} parent=1 // pred_check
      _
    $region19: #{_tied_projection_2d.1} parent=1 // pred_check_branch
      %162 = sbr.rel (0) target = $region21
    $region20: #{_tied_projection_2d.1} parent=1 // pred_region
      %163 = dma.done [#allocation6], 256
    $region21: #{_tied_projection_2d.1} parent=1 // pred_fallthru
      _
    %164 = vsyncpa [#allocation5], 1
    %165 = vsyncpa [#allocation6], 1

</llo_original>
